<compile_context>
chip_gen: v7x
topology: tpu7x:2x2x1
jax: 0.10.0
libtpu: 0.0.40
codegen_flags: <defaults>
</compile_context>

<pallas_src>
import functools

import jax
import jax.numpy as jnp
from jax import lax
from jax.experimental import pallas as pl
from jax.experimental.pallas import tpu as pltpu


def _conv1d_same_relu(x, w_fold, b, *, K):
    """'same'-padded Conv1d (stride 1) + bias + ReLU on one (L, Cin) slab.

    x:      (L, Cin)       activations (values already resident in vregs)
    w_fold: (K*Cin, Cout)  taps folded into the contraction dimension
    b:      (1, Cout)
    returns (L, Cout) float32
    """
    L, Cin = x.shape
    left = (K - 1) // 2           # PyTorch 'same' split (stride 1, dilation 1)
    right = (K - 1) - left

    # In-kernel zero padding along the length (sublane) axis.
    parts = []
    if left:
        parts.append(jnp.zeros((left, Cin), x.dtype))
    parts.append(x)
    if right:
        parts.append(jnp.zeros((right, Cin), x.dtype))
    xp = jnp.concatenate(parts, axis=0) if len(parts) > 1 else x   # (L+K-1, Cin)

    # im2col fold: x2[l, k*Cin + c] = xp[l + k, c]  ->  one MXU matmul.
    x2 = jnp.concatenate([xp[k:k + L, :] for k in range(K)], axis=-1)  # (L, K*Cin)

    y = jnp.dot(x2, w_fold, preferred_element_type=jnp.float32) + b   # (L, Cout)
    return jnp.maximum(y, 0.0)


def fused_convnn_kernel(x_ref, w1_ref, b1_ref, w2_ref, b2_ref, w3_ref, b3_ref,
                        o_ref, *, K):
    """One batch element: all three Conv1d+ReLU layers, intermediates in VMEM."""
    x = x_ref[0].astype(jnp.float32)                              # (L, Cin)
    h = _conv1d_same_relu(x, w1_ref[...], b1_ref[...], K=K)       # (L, C1)
    h = _conv1d_same_relu(h, w2_ref[...], b2_ref[...], K=K)       # (L, C2)
    h = _conv1d_same_relu(h, w3_ref[...], b3_ref[...], K=K)       # (L, C3)
    o_ref[0] = h.astype(o_ref.dtype)


def conv_nn_forward(x_ncl, params):
    """ConvNN.forward: x in NCL (like PyTorch), returns NCL."""
    N, Cin, L = x_ncl.shape
    (w1, b1), (w2, b2), (w3, b3) = params
    K = w1.shape[0]
    C1, C2, C3 = w1.shape[2], w2.shape[2], w3.shape[2]

    x_nlc = jnp.transpose(x_ncl, (0, 2, 1))                       # NCL -> NLC

    # Fold taps into the contraction dim: (K, Cin, Cout) -> (K*Cin, Cout).
    w1f = w1.reshape(K * Cin, C1)
    w2f = w2.reshape(K * C1, C2)
    w3f = w3.reshape(K * C2, C3)
    b1r, b2r, b3r = b1.reshape(1, C1), b2.reshape(1, C2), b3.reshape(1, C3)

    out_nlc = pl.pallas_call(
        functools.partial(fused_convnn_kernel, K=K),
        out_shape=jax.ShapeDtypeStruct((N, L, C3), x_ncl.dtype),
        grid=(N,),
        in_specs=[
            pl.BlockSpec((1, L, Cin), lambda n: (n, 0, 0)),       # per-batch tile
            pl.BlockSpec((K * Cin, C1), lambda n: (0, 0)),        # full weights,
            pl.BlockSpec((1, C1), lambda n: (0, 0)),              # resident in VMEM
            pl.BlockSpec((K * C1, C2), lambda n: (0, 0)),
            pl.BlockSpec((1, C2), lambda n: (0, 0)),
            pl.BlockSpec((K * C2, C3), lambda n: (0, 0)),
            pl.BlockSpec((1, C3), lambda n: (0, 0)),
        ],
        out_specs=pl.BlockSpec((1, L, C3), lambda n: (n, 0, 0)),
        compiler_params=pltpu.CompilerParams(
            dimension_semantics=("parallel",),                    # >=2 steps -> both v7x TCs
        ),
    )(x_nlc, w1f, b1r, w2f, b2r, w3f, b3r)

    return jnp.transpose(out_nlc, (0, 2, 1))                      # NLC -> NCL


def init_conv1d_params(key, cin, cout, k):
    """Deterministic init mimicking PyTorch Conv1d default (uniform +-1/sqrt(fan_in*k))."""
    kw, kb = jax.random.split(key)
    bound = 1.0 / jnp.sqrt(cin * k)
    w = jax.random.uniform(kw, (k, cin, cout), jnp.float32, -bound, bound)
    b = jax.random.uniform(kb, (cout,), jnp.float32, -bound, bound)
    return w, b


def reference_forward(x_ncl, params):
    """Pure-JAX reference using lax.conv_general_dilated (NCL layout)."""
    x = x_ncl
    for (w_kio, b) in params:
        k = w_kio.shape[0]
        left = (k - 1) // 2
        right = (k - 1) - left
        w_oik = jnp.transpose(w_kio, (2, 1, 0))                   # (Cout, Cin, K)
        y = lax.conv_general_dilated(
            x, w_oik, window_strides=(1,), padding=[(left, right)],
            dimension_numbers=("NCH", "OIH", "NCH"),
        )
        x = jnp.maximum(y + b[None, :, None], 0.0)
    return x


if __name__ == "__main__":
    # Small shapes consistent with the module.
    in_dim, c_dim, kernel_size = 4, 8, 3
    N, L = 2, 16

    key = jax.random.PRNGKey(0)
    kx, k1, k2, k3 = jax.random.split(key, 4)

    x = jax.random.normal(kx, (N, in_dim, L), jnp.float32)        # NCL, like PyTorch

    params = [
        init_conv1d_params(k1, in_dim, c_dim, kernel_size),
        init_conv1d_params(k2, c_dim, c_dim * 2, kernel_size),
        init_conv1d_params(k3, c_dim * 2, c_dim * 3, kernel_size),
    ]

    out = jax.jit(conv_nn_forward)(x, params)
    out = jax.block_until_ready(out)

    ref = reference_forward(x, params)
    assert out.shape == (N, c_dim * 3, L), out.shape
    assert jnp.allclose(out, ref, atol=1e-4, rtol=1e-4), "mismatch vs reference"

    print("KERNEL_OK")
</pallas_src>

<mosaic_0001>
module attributes {stable_mosaic.version = 11 : i64} {
  func.func @fused_convnn_kernel(%arg0: i32, %arg1: memref<1x16x4xf32, #tpu.memory_space<vmem>>, %arg2: memref<12x8xf32, #tpu.memory_space<vmem>>, %arg3: memref<1x8xf32, #tpu.memory_space<vmem>>, %arg4: memref<24x16xf32, #tpu.memory_space<vmem>>, %arg5: memref<1x16xf32, #tpu.memory_space<vmem>>, %arg6: memref<48x24xf32, #tpu.memory_space<vmem>>, %arg7: memref<1x24xf32, #tpu.memory_space<vmem>>, %arg8: memref<1x16x24xf32, #tpu.memory_space<vmem>>) attributes {dimension_semantics = [#tpu.dimension_semantics<parallel>], iteration_bounds = array<i64: 2>, scalar_prefetch = 0 : i64, scratch_operands = 0 : i64, tpu.core_type = #tpu.core_type<tc>, window_params = [{transform_indices = @transform_0, window_bounds = array<i64: 1, 16, 4>}, {pipeline_mode = #tpu.pipeline_mode<synchronous>, transform_indices = @transform_1, window_bounds = array<i64: 12, 8>}, {pipeline_mode = #tpu.pipeline_mode<synchronous>, transform_indices = @transform_2, window_bounds = array<i64: 1, 8>}, {pipeline_mode = #tpu.pipeline_mode<synchronous>, transform_indices = @transform_3, window_bounds = array<i64: 24, 16>}, {pipeline_mode = #tpu.pipeline_mode<synchronous>, transform_indices = @transform_4, window_bounds = array<i64: 1, 16>}, {pipeline_mode = #tpu.pipeline_mode<synchronous>, transform_indices = @transform_5, window_bounds = array<i64: 48, 24>}, {pipeline_mode = #tpu.pipeline_mode<synchronous>, transform_indices = @transform_6, window_bounds = array<i64: 1, 24>}, {transform_indices = @transform_7, window_bounds = array<i64: 1, 16, 24>}]} {
    %c0 = arith.constant 0 : index
    %c0_0 = arith.constant 0 : index
    %c0_1 = arith.constant 0 : index
    %0 = vector.load %arg1[%c0, %c0_0, %c0_1] : memref<1x16x4xf32, #tpu.memory_space<vmem>>, vector<1x16x4xf32>
    %1 = vector.shape_cast %0 : vector<1x16x4xf32> to vector<16x4xf32>
    %c0_2 = arith.constant 0 : index
    %c0_3 = arith.constant 0 : index
    %2 = vector.load %arg2[%c0_2, %c0_3] : memref<12x8xf32, #tpu.memory_space<vmem>>, vector<12x8xf32>
    %c0_4 = arith.constant 0 : index
    %c0_5 = arith.constant 0 : index
    %3 = vector.load %arg3[%c0_4, %c0_5] : memref<1x8xf32, #tpu.memory_space<vmem>>, vector<1x8xf32>
    %cst = arith.constant 0.000000e+00 : f32
    %4 = vector.broadcast %cst : f32 to vector<1x4xf32>
    %cst_6 = arith.constant 0.000000e+00 : f32
    %5 = vector.broadcast %cst_6 : f32 to vector<1x4xf32>
    %6 = tpu.concatenate %4, %1, %5 in 0 : vector<1x4xf32>, vector<16x4xf32>, vector<1x4xf32> -> vector<18x4xf32>
    %7 = vector.extract_strided_slice %6 {offsets = [0, 0], sizes = [16, 4], strides = [1, 1]} : vector<18x4xf32> to vector<16x4xf32>
    %8 = vector.extract_strided_slice %6 {offsets = [1, 0], sizes = [16, 4], strides = [1, 1]} : vector<18x4xf32> to vector<16x4xf32>
    %9 = vector.extract_strided_slice %6 {offsets = [2, 0], sizes = [16, 4], strides = [1, 1]} : vector<18x4xf32> to vector<16x4xf32>
    %10 = tpu.concatenate %7, %8, %9 in 1 : vector<16x4xf32>, vector<16x4xf32>, vector<16x4xf32> -> vector<16x12xf32>
    %cst_7 = arith.constant dense<0.000000e+00> : vector<16x8xf32>
    %11 = tpu.matmul %10, %2, %cst_7 {dimension_numbers = #tpu.dot_dimension_numbers<[1], [0], [0], [1], [0, 0, 1, 1], [], []>} : vector<16x12xf32>, vector<12x8xf32>, vector<16x8xf32> -> vector<16x8xf32>
    %12 = vector.broadcast %3 : vector<1x8xf32> to vector<16x8xf32>
    %13 = arith.addf %11, %12 : vector<16x8xf32>
    %cst_8 = arith.constant 0.000000e+00 : f32
    %14 = vector.broadcast %cst_8 : f32 to vector<16x8xf32>
    %15 = arith.maximumf %13, %14 : vector<16x8xf32>
    %c0_9 = arith.constant 0 : index
    %c0_10 = arith.constant 0 : index
    %16 = vector.load %arg4[%c0_9, %c0_10] : memref<24x16xf32, #tpu.memory_space<vmem>>, vector<24x16xf32>
    %c0_11 = arith.constant 0 : index
    %c0_12 = arith.constant 0 : index
    %17 = vector.load %arg5[%c0_11, %c0_12] : memref<1x16xf32, #tpu.memory_space<vmem>>, vector<1x16xf32>
    %cst_13 = arith.constant 0.000000e+00 : f32
    %18 = vector.broadcast %cst_13 : f32 to vector<1x8xf32>
    %cst_14 = arith.constant 0.000000e+00 : f32
    %19 = vector.broadcast %cst_14 : f32 to vector<1x8xf32>
    %20 = tpu.concatenate %18, %15, %19 in 0 : vector<1x8xf32>, vector<16x8xf32>, vector<1x8xf32> -> vector<18x8xf32>
    %21 = vector.extract_strided_slice %20 {offsets = [0, 0], sizes = [16, 8], strides = [1, 1]} : vector<18x8xf32> to vector<16x8xf32>
    %22 = vector.extract_strided_slice %20 {offsets = [1, 0], sizes = [16, 8], strides = [1, 1]} : vector<18x8xf32> to vector<16x8xf32>
    %23 = vector.extract_strided_slice %20 {offsets = [2, 0], sizes = [16, 8], strides = [1, 1]} : vector<18x8xf32> to vector<16x8xf32>
    %24 = tpu.concatenate %21, %22, %23 in 1 : vector<16x8xf32>, vector<16x8xf32>, vector<16x8xf32> -> vector<16x24xf32>
    %cst_15 = arith.constant dense<0.000000e+00> : vector<16x16xf32>
    %25 = tpu.matmul %24, %16, %cst_15 {dimension_numbers = #tpu.dot_dimension_numbers<[1], [0], [0], [1], [0, 0, 1, 1], [], []>} : vector<16x24xf32>, vector<24x16xf32>, vector<16x16xf32> -> vector<16x16xf32>
    %26 = vector.broadcast %17 : vector<1x16xf32> to vector<16x16xf32>
    %27 = arith.addf %25, %26 : vector<16x16xf32>
    %cst_16 = arith.constant 0.000000e+00 : f32
    %28 = vector.broadcast %cst_16 : f32 to vector<16x16xf32>
    %29 = arith.maximumf %27, %28 : vector<16x16xf32>
    %c0_17 = arith.constant 0 : index
    %c0_18 = arith.constant 0 : index
    %30 = vector.load %arg6[%c0_17, %c0_18] : memref<48x24xf32, #tpu.memory_space<vmem>>, vector<48x24xf32>
    %c0_19 = arith.constant 0 : index
    %c0_20 = arith.constant 0 : index
    %31 = vector.load %arg7[%c0_19, %c0_20] : memref<1x24xf32, #tpu.memory_space<vmem>>, vector<1x24xf32>
    %cst_21 = arith.constant 0.000000e+00 : f32
    %32 = vector.broadcast %cst_21 : f32 to vector<1x16xf32>
    %cst_22 = arith.constant 0.000000e+00 : f32
    %33 = vector.broadcast %cst_22 : f32 to vector<1x16xf32>
    %34 = tpu.concatenate %32, %29, %33 in 0 : vector<1x16xf32>, vector<16x16xf32>, vector<1x16xf32> -> vector<18x16xf32>
    %35 = vector.extract_strided_slice %34 {offsets = [0, 0], sizes = [16, 16], strides = [1, 1]} : vector<18x16xf32> to vector<16x16xf32>
    %36 = vector.extract_strided_slice %34 {offsets = [1, 0], sizes = [16, 16], strides = [1, 1]} : vector<18x16xf32> to vector<16x16xf32>
    %37 = vector.extract_strided_slice %34 {offsets = [2, 0], sizes = [16, 16], strides = [1, 1]} : vector<18x16xf32> to vector<16x16xf32>
    %38 = tpu.concatenate %35, %36, %37 in 1 : vector<16x16xf32>, vector<16x16xf32>, vector<16x16xf32> -> vector<16x48xf32>
    %cst_23 = arith.constant dense<0.000000e+00> : vector<16x24xf32>
    %39 = tpu.matmul %38, %30, %cst_23 {dimension_numbers = #tpu.dot_dimension_numbers<[1], [0], [0], [1], [0, 0, 1, 1], [], []>} : vector<16x48xf32>, vector<48x24xf32>, vector<16x24xf32> -> vector<16x24xf32>
    %40 = vector.broadcast %31 : vector<1x24xf32> to vector<16x24xf32>
    %41 = arith.addf %39, %40 : vector<16x24xf32>
    %cst_24 = arith.constant 0.000000e+00 : f32
    %42 = vector.broadcast %cst_24 : f32 to vector<16x24xf32>
    %43 = arith.maximumf %41, %42 : vector<16x24xf32>
    %c0_25 = arith.constant 0 : index
    %c0_26 = arith.constant 0 : index
    %c0_27 = arith.constant 0 : index
    %44 = vector.load %arg8[%c0_25, %c0_26, %c0_27] : memref<1x16x24xf32, #tpu.memory_space<vmem>>, vector<1x16x24xf32>
    %45 = vector.shape_cast %44 : vector<1x16x24xf32> to vector<16x24xf32>
    %46 = vector.shape_cast %43 : vector<16x24xf32> to vector<1x16x24xf32>
    tpu.vector_store %arg8[%c0_25, %c0_26, %c0_27], %46 {strides = array<i32>} : memref<1x16x24xf32, #tpu.memory_space<vmem>>, vector<1x16x24xf32>,
    return
  }
  func.func @transform_0(%arg0: i32) -> (i32, i32, i32) {
    %c0_i32 = arith.constant 0 : i32
    %c0_i32_0 = arith.constant 0 : i32
    %c0_i32_1 = arith.constant 0 : i32
    return %arg0, %c0_i32, %c0_i32_0 : i32, i32, i32
  }
  func.func @transform_1(%arg0: i32) -> (i32, i32) {
    %c0_i32 = arith.constant 0 : i32
    %c0_i32_0 = arith.constant 0 : i32
    %c0_i32_1 = arith.constant 0 : i32
    return %c0_i32, %c0_i32_0 : i32, i32
  }
  func.func @transform_2(%arg0: i32) -> (i32, i32) {
    %c0_i32 = arith.constant 0 : i32
    %c0_i32_0 = arith.constant 0 : i32
    %c0_i32_1 = arith.constant 0 : i32
    return %c0_i32, %c0_i32_0 : i32, i32
  }
  func.func @transform_3(%arg0: i32) -> (i32, i32) {
    %c0_i32 = arith.constant 0 : i32
    %c0_i32_0 = arith.constant 0 : i32
    %c0_i32_1 = arith.constant 0 : i32
    return %c0_i32, %c0_i32_0 : i32, i32
  }
  func.func @transform_4(%arg0: i32) -> (i32, i32) {
    %c0_i32 = arith.constant 0 : i32
    %c0_i32_0 = arith.constant 0 : i32
    %c0_i32_1 = arith.constant 0 : i32
    return %c0_i32, %c0_i32_0 : i32, i32
  }
  func.func @transform_5(%arg0: i32) -> (i32, i32) {
    %c0_i32 = arith.constant 0 : i32
    %c0_i32_0 = arith.constant 0 : i32
    %c0_i32_1 = arith.constant 0 : i32
    return %c0_i32, %c0_i32_0 : i32, i32
  }
  func.func @transform_6(%arg0: i32) -> (i32, i32) {
    %c0_i32 = arith.constant 0 : i32
    %c0_i32_0 = arith.constant 0 : i32
    %c0_i32_1 = arith.constant 0 : i32
    return %c0_i32, %c0_i32_0 : i32, i32
  }
  func.func @transform_7(%arg0: i32) -> (i32, i32, i32) {
    %c0_i32 = arith.constant 0 : i32
    %c0_i32_0 = arith.constant 0 : i32
    %c0_i32_1 = arith.constant 0 : i32
    return %arg0, %c0_i32, %c0_i32_0 : i32, i32, i32
  }
}

</mosaic_0001>

<llo_original>
// kernel: conv_nn_forward.1
$region0: #{conv_nn_forward.1}
  #allocation0 [shape = 'u32[]', space=smem, size = 0x4, offset = 0x4, fixed_abs, tag = 'smem constant byte address 0x4 - core index']
  #allocation1 [shape = 'u32[144,128]{1,0:T(1,128)}', space=vmem, size = 0x12000, scoped, tag = 'internal scratch']
  %s0 = inlined_call_operand.vmem [shape: f32[2,16,4], index: 0, kind: input, shape index: {}]
  %s1 = inlined_call_operand.vmem [shape: f32[12,8], index: 1, kind: input, shape index: {}]
  %s2 = inlined_call_operand.vmem [shape: f32[1,8], index: 2, kind: input, shape index: {}]
  %s3 = inlined_call_operand.vmem [shape: f32[24,16], index: 3, kind: input, shape index: {}]
  %s4 = inlined_call_operand.vmem [shape: f32[1,16], index: 4, kind: input, shape index: {}]
  %s5 = inlined_call_operand.vmem [shape: f32[48,24], index: 5, kind: input, shape index: {}]
  %s6 = inlined_call_operand.vmem [shape: f32[1,24], index: 6, kind: input, shape index: {}]
  %s7 = inlined_call_operand.hbm [shape: f32[2,16,24], index: 7, kind: output, shape index: {}]
  %s8 = sld [smem:[#allocation0]]
  $region61: #{conv_nn_forward.1} parent=0
    _
  %s10 = ssub.s32 1, %s8
  %s11 = scalar_select 0, %s10, %s8
  $region1: #{conv_nn_forward.1} parent=0
    #allocation2 [shape = 'u8[16384]{0}', space=vmem, size = 0x4000, scoped, tag = 'output window, operand 0']
    #allocation3 [shape = 's32[2]{0}', space=sflag, size = 0x8, scoped, tag = 'scoped memory for conv_nn_forward.1']
    %12 = vsyncpa [#allocation3], 0
    %s13 = scalar_lea.sflag [#allocation3], 1
    %14 = vsyncpa %s13, 0
    loop: start=0, step=1, limit=4
    $region2: #{conv_nn_forward.1} parent=1 // loop_pre_header
      _
    $region3: #{conv_nn_forward.1} parent=1 // loop_header
      %s16 = sphi 0, %s20
      %p17 = scmp.ge.s32.totalorder %s16, 4
      %s26 = sphi 0, %s28
      %s29 = sphi 0, %s26
      %s30 = sphi 0, %s29
      %s46 = sphi 0, %s30
      %s50 = sphi 0, %s50
      %s52 = sphi 0, %s50
      %s53 = sphi 0, %s52
      %s67 = sphi 0, %s53
      %s71 = sphi 0, %s71
      %s73 = sphi 0, %s71
      %s74 = sphi 0, %s73
      %s88 = sphi 0, %s74
      %s92 = sphi 0, %s92
      %s94 = sphi 0, %s92
      %s95 = sphi 0, %s94
      %s109 = sphi 0, %s95
      %s113 = sphi 0, %s113
      %s115 = sphi 0, %s113
      %s116 = sphi 0, %s115
      %s130 = sphi 0, %s116
      %s134 = sphi 0, %s134
      %s136 = sphi 0, %s134
      %s137 = sphi 0, %s136
      %s151 = sphi 0, %s137
      %s155 = sphi 0, %s155
      %s157 = sphi 0, %s155
      %s158 = sphi 0, %s157
      %s172 = sphi 0, %s158
      %s178 = sphi 0, %s180
      %s181 = sphi 0, %s178
      %s182 = sphi 0, %s181
      %s198 = sphi 0, %s182
    $region4: #{conv_nn_forward.1} parent=1 // loop_header_branch
      %19 = sbr.rel (%p17) target = $region8
    $region5: #{conv_nn_forward.1} parent=1 // loop_body
      %s21 = ssub.s32 %s16, 1
      %s22 = ssub.s32 %s16, 2
      %s23 = sadd.s32 %s16, 1
      %s24 = ssub.s32 %s16, %s23
      %p25 = scmp.eq.s32.totalorder %s24, 0
      %s27 = sadd.s32 %s26, 1
      %s28 = scalar_select %p25, %s26, %s27
      %p31 = pneg %p25
      %p32 = scmp.eq.s32.totalorder %s16, 1
      %p33 = por %p31, %p32
      %p34 = scmp.ne.s32.totalorder %s26, %s29
      %p35 = scmp.eq.s32.totalorder %s16, 0
      %p36 = por %p34, %p35
      %p37 = scmp.ne.s32.totalorder %s26, %s29
      %p38 = scmp.eq.s32.totalorder %s21, 1
      %p39 = por %p37, %p38
      %p40 = scmp.ne.s32.totalorder %s29, %s30
      %p41 = scmp.eq.s32.totalorder %s21, 0
      %p42 = por %p40, %p41
      %p43 = scmp.ne.s32.totalorder %s29, %s30
      %p44 = scmp.eq.s32.totalorder %s22, 1
      %p45 = por %p43, %p44
      %p47 = scmp.ne.s32.totalorder %s30, %s46
      %p48 = scmp.eq.s32.totalorder %s22, 0
      %p49 = por %p47, %p48
      %s51 = sadd.s32 %s50, 1
      %p54 = scmp.eq.s32.totalorder %s16, 1
      %p55 = scmp.ne.s32.totalorder %s50, %s52
      %p56 = scmp.eq.s32.totalorder %s16, 0
      %p57 = por %p55, %p56
      %p58 = scmp.ne.s32.totalorder %s50, %s52
      %p59 = scmp.eq.s32.totalorder %s21, 1
      %p60 = por %p58, %p59
      %p61 = scmp.ne.s32.totalorder %s52, %s53
      %p62 = scmp.eq.s32.totalorder %s21, 0
      %p63 = por %p61, %p62
      %p64 = scmp.ne.s32.totalorder %s52, %s53
      %p65 = scmp.eq.s32.totalorder %s22, 1
      %p66 = por %p64, %p65
      %p68 = scmp.ne.s32.totalorder %s53, %s67
      %p69 = scmp.eq.s32.totalorder %s22, 0
      %p70 = por %p68, %p69
      %s72 = sadd.s32 %s71, 1
      %p75 = scmp.eq.s32.totalorder %s16, 1
      %p76 = scmp.ne.s32.totalorder %s71, %s73
      %p77 = scmp.eq.s32.totalorder %s16, 0
      %p78 = por %p76, %p77
      %p79 = scmp.ne.s32.totalorder %s71, %s73
      %p80 = scmp.eq.s32.totalorder %s21, 1
      %p81 = por %p79, %p80
      %p82 = scmp.ne.s32.totalorder %s73, %s74
      %p83 = scmp.eq.s32.totalorder %s21, 0
      %p84 = por %p82, %p83
      %p85 = scmp.ne.s32.totalorder %s73, %s74
      %p86 = scmp.eq.s32.totalorder %s22, 1
      %p87 = por %p85, %p86
      %p89 = scmp.ne.s32.totalorder %s74, %s88
      %p90 = scmp.eq.s32.totalorder %s22, 0
      %p91 = por %p89, %p90
      %s93 = sadd.s32 %s92, 1
      %p96 = scmp.eq.s32.totalorder %s16, 1
      %p97 = scmp.ne.s32.totalorder %s92, %s94
      %p98 = scmp.eq.s32.totalorder %s16, 0
      %p99 = por %p97, %p98
      %p100 = scmp.ne.s32.totalorder %s92, %s94
      %p101 = scmp.eq.s32.totalorder %s21, 1
      %p102 = por %p100, %p101
      %p103 = scmp.ne.s32.totalorder %s94, %s95
      %p104 = scmp.eq.s32.totalorder %s21, 0
      %p105 = por %p103, %p104
      %p106 = scmp.ne.s32.totalorder %s94, %s95
      %p107 = scmp.eq.s32.totalorder %s22, 1
      %p108 = por %p106, %p107
      %p110 = scmp.ne.s32.totalorder %s95, %s109
      %p111 = scmp.eq.s32.totalorder %s22, 0
      %p112 = por %p110, %p111
      %s114 = sadd.s32 %s113, 1
      %p117 = scmp.eq.s32.totalorder %s16, 1
      %p118 = scmp.ne.s32.totalorder %s113, %s115
      %p119 = scmp.eq.s32.totalorder %s16, 0
      %p120 = por %p118, %p119
      %p121 = scmp.ne.s32.totalorder %s113, %s115
      %p122 = scmp.eq.s32.totalorder %s21, 1
      %p123 = por %p121, %p122
      %p124 = scmp.ne.s32.totalorder %s115, %s116
      %p125 = scmp.eq.s32.totalorder %s21, 0
      %p126 = por %p124, %p125
      %p127 = scmp.ne.s32.totalorder %s115, %s116
      %p128 = scmp.eq.s32.totalorder %s22, 1
      %p129 = por %p127, %p128
      %p131 = scmp.ne.s32.totalorder %s116, %s130
      %p132 = scmp.eq.s32.totalorder %s22, 0
      %p133 = por %p131, %p132
      %s135 = sadd.s32 %s134, 1
      %p138 = scmp.eq.s32.totalorder %s16, 1
      %p139 = scmp.ne.s32.totalorder %s134, %s136
      %p140 = scmp.eq.s32.totalorder %s16, 0
      %p141 = por %p139, %p140
      %p142 = scmp.ne.s32.totalorder %s134, %s136
      %p143 = scmp.eq.s32.totalorder %s21, 1
      %p144 = por %p142, %p143
      %p145 = scmp.ne.s32.totalorder %s136, %s137
      %p146 = scmp.eq.s32.totalorder %s21, 0
      %p147 = por %p145, %p146
      %p148 = scmp.ne.s32.totalorder %s136, %s137
      %p149 = scmp.eq.s32.totalorder %s22, 1
      %p150 = por %p148, %p149
      %p152 = scmp.ne.s32.totalorder %s137, %s151
      %p153 = scmp.eq.s32.totalorder %s22, 0
      %p154 = por %p152, %p153
      %s156 = sadd.s32 %s155, 1
      %p159 = scmp.eq.s32.totalorder %s16, 1
      %p160 = scmp.ne.s32.totalorder %s155, %s157
      %p161 = scmp.eq.s32.totalorder %s16, 0
      %p162 = por %p160, %p161
      %p163 = scmp.ne.s32.totalorder %s155, %s157
      %p164 = scmp.eq.s32.totalorder %s21, 1
      %p165 = por %p163, %p164
      %p166 = scmp.ne.s32.totalorder %s157, %s158
      %p167 = scmp.eq.s32.totalorder %s21, 0
      %p168 = por %p166, %p167
      %p169 = scmp.ne.s32.totalorder %s157, %s158
      %p170 = scmp.eq.s32.totalorder %s22, 1
      %p171 = por %p169, %p170
      %p173 = scmp.ne.s32.totalorder %s158, %s172
      %p174 = scmp.eq.s32.totalorder %s22, 0
      %p175 = por %p173, %p174
      %s176 = ssub.s32 %s16, %s23
      %p177 = scmp.eq.s32.totalorder %s176, 0
      %s179 = sadd.s32 %s178, 1
      %s180 = scalar_select %p177, %s178, %s179
      %p183 = pneg %p177
      %p184 = scmp.eq.s32.totalorder %s16, 1
      %p185 = por %p183, %p184
      %p186 = scmp.ne.s32.totalorder %s178, %s181
      %p187 = scmp.eq.s32.totalorder %s16, 0
      %p188 = por %p186, %p187
      %p189 = scmp.ne.s32.totalorder %s178, %s181
      %p190 = scmp.eq.s32.totalorder %s21, 1
      %p191 = por %p189, %p190
      %p192 = scmp.ne.s32.totalorder %s181, %s182
      %p193 = scmp.eq.s32.totalorder %s21, 0
      %p194 = por %p192, %p193
      %p195 = scmp.ne.s32.totalorder %s181, %s182
      %p196 = scmp.eq.s32.totalorder %s22, 1
      %p197 = por %p195, %p196
      %p199 = scmp.ne.s32.totalorder %s182, %s198
      %p200 = scmp.eq.s32.totalorder %s22, 0
      %p201 = por %p199, %p200
      %p202 = scmp.le.s32.totalorder 1, %s16
      %p203 = scmp.lt.s32.totalorder %s16, 3
      %p204 = pnand %p202, %p203
      %p205 = pneg %p204
      // Predicated region
      $region9: #{conv_nn_forward.1} parent=5 // pred_check
        _
      $region10: #{conv_nn_forward.1} parent=5 // pred_check_branch
        %207 = sbr.rel (%p204) target = $region12
      $region11: #{conv_nn_forward.1} parent=5 // pred_region
        %s208 = ssub.s32 %s16, 1
        // Predicated region
        $region13: #{conv_nn_forward.1} parent=11 // pred_check
          %p209 = pneg %p63
        $region14: #{conv_nn_forward.1} parent=11 // pred_check_branch
          %211 = sbr.rel (%p209) target = $region16
        $region15: #{conv_nn_forward.1} parent=11 // pred_region
          _
        $region16: #{conv_nn_forward.1} parent=11 // pred_fallthru
          _
        // Predicated region
        $region17: #{conv_nn_forward.1} parent=11 // pred_check
          %p212 = pneg %p84
        $region18: #{conv_nn_forward.1} parent=11 // pred_check_branch
          %214 = sbr.rel (%p212) target = $region20
        $region19: #{conv_nn_forward.1} parent=11 // pred_region
          _
        $region20: #{conv_nn_forward.1} parent=11 // pred_fallthru
          _
        // Predicated region
        $region21: #{conv_nn_forward.1} parent=11 // pred_check
          %p215 = pneg %p105
        $region22: #{conv_nn_forward.1} parent=11 // pred_check_branch
          %217 = sbr.rel (%p215) target = $region24
        $region23: #{conv_nn_forward.1} parent=11 // pred_region
          _
        $region24: #{conv_nn_forward.1} parent=11 // pred_fallthru
          _
        // Predicated region
        $region25: #{conv_nn_forward.1} parent=11 // pred_check
          %p218 = pneg %p126
        $region26: #{conv_nn_forward.1} parent=11 // pred_check_branch
          %220 = sbr.rel (%p218) target = $region28
        $region27: #{conv_nn_forward.1} parent=11 // pred_region
          _
        $region28: #{conv_nn_forward.1} parent=11 // pred_fallthru
          _
        // Predicated region
        $region29: #{conv_nn_forward.1} parent=11 // pred_check
          %p221 = pneg %p147
        $region30: #{conv_nn_forward.1} parent=11 // pred_check_branch
          %223 = sbr.rel (%p221) target = $region32
        $region31: #{conv_nn_forward.1} parent=11 // pred_region
          _
        $region32: #{conv_nn_forward.1} parent=11 // pred_fallthru
          _
        // Predicated region
        $region33: #{conv_nn_forward.1} parent=11 // pred_check
          %p224 = pneg %p168
        $region34: #{conv_nn_forward.1} parent=11 // pred_check_branch
          %226 = sbr.rel (%p224) target = $region36
        $region35: #{conv_nn_forward.1} parent=11 // pred_region
          _
        $region36: #{conv_nn_forward.1} parent=11 // pred_fallthru
          _
      $region12: #{conv_nn_forward.1} parent=5 // pred_fallthru
        _
      %p227 = scmp.lt.s32.totalorder %s16, 2
      // Predicated region
      $region37: #{conv_nn_forward.1} parent=5 // pred_check
        %p228 = pneg %p227
      $region38: #{conv_nn_forward.1} parent=5 // pred_check_branch
        %230 = sbr.rel (%p228) target = $region40
      $region39: #{conv_nn_forward.1} parent=5 // pred_region
        // Predicated region
        $region41: #{conv_nn_forward.1} parent=39 // pred_check
          %p231 = pneg %p36
        $region42: #{conv_nn_forward.1} parent=39 // pred_check_branch
          %233 = sbr.rel (%p231) target = $region44
        $region43: #{conv_nn_forward.1} parent=39 // pred_region
          %p234 = scmp.lt.s32.totalorder %s16, 1
          %s235 = scalar_select %p234, %s16, 1
          %s236 = smul.addr %s235, 2
          %s237 = smul.addr %s236, 8
          %s238 = scalar_lea.vmem %s0, %s237
        $region44: #{conv_nn_forward.1} parent=39 // pred_fallthru
          _
      $region40: #{conv_nn_forward.1} parent=5 // pred_fallthru
        _
      %p239 = scmp.le.s32.totalorder 1, %s16
      %p240 = scmp.lt.s32.totalorder %s16, 3
      %p241 = pnand %p239, %p240
      %p242 = pneg %p241
      // Predicated region
      $region45: #{conv_nn_forward.1} parent=5 // pred_check
        _
      $region46: #{conv_nn_forward.1} parent=5 // pred_check_branch
        %244 = sbr.rel (%p241) target = $region48
      $region47: #{conv_nn_forward.1} parent=5 // pred_region
        %s245 = ssub.s32 %s16, 1
        %p246 = scmp.lt.s32.totalorder %s21, 1
        %s247 = scalar_select %p246, %s21, 1
        %s248 = smul.addr %s247, 2
        %s249 = smul.addr %s248, 8
        %s250 = scalar_lea.vmem %s0, %s249
        %p251 = pneg %p42
        %p252 = pneg %p39
        %p253 = pneg %p63
        %p254 = pneg %p60
        %p255 = pneg %p84
        %p256 = pneg %p81
        %p257 = pneg %p105
        %p258 = pneg %p102
        %p259 = pneg %p126
        %p260 = pneg %p123
        %p261 = pneg %p147
        %p262 = pneg %p144
        %p263 = pneg %p168
        %p264 = pneg %p165
        %p265 = pneg %p194
        %p266 = pneg %p191
        %s267 = sand.u32 %s181, 1
        %s268 = scalar_lea.sflag [#allocation3], %s267
        %s269 = sand.u32 %s181, 1
        %s270 = smul.addr %s269, 16
        %s271 = scalar_lea.vmem [#allocation2], %s270
        %p272 = scmp.lt.s32.totalorder %s21, 1
        %s273 = scalar_select %p272, %s21, 1
        %s274 = smul.addr %s273, 2
        %s275 = smul.addr %s274, 8
        %s276 = scalar_lea.vmem %s0, %s275
        %v277 = vld [vmem:[%s276] sm:$0xff]
        %v278 = vld [vmem:[%s276 + $0x8] sm:$0xff]
        %v279 = vld [vmem:[%s1] sm:$0xff]
        %v280 = vld [vmem:[%s1 + $0x8] sm:$0xf]
        %v281 = vld [vmem:[%s2] sm:$0x1]
        %vm284 = vcmask 1040384
        %v285 = vrot.slane %v277, 7
        %v286 = vrot.slane %v278, 7
        %v287 = vsel %vm284, %v285, %v286
        %v291 = vsel %vm284, 0.0, %v285
        %v292 = vsel %vm284, %v286, 0.0
        %vm295 = vcmask 1046528
        %v296 = vrot.slane %v291, 1
        %v297 = vrot.slane %v287, 1
        %v298 = vsel %vm295, %v296, %v297
        %v299 = vrot.slane %v292, 1
        %v300 = vsel %vm295, %v297, %v299
        %301 = vrot.lane.b32.xlu0 %v298, 4
        %v302 = vpop.permute.xlu0 %301
        %303 = vrot.lane.b32.xlu0 %v300, 4
        %v304 = vpop.permute.xlu0 %303
        %vm307 = vcmask 1045504
        %v308 = vrot.slane %v291, 2
        %v309 = vrot.slane %v287, 2
        %v310 = vsel %vm307, %v308, %v309
        %v311 = vrot.slane %v292, 2
        %v312 = vsel %vm307, %v309, %v311
        %313 = vrot.lane.b32.xlu0 %v310, 8
        %v314 = vpop.permute.xlu0 %313
        %315 = vrot.lane.b32.xlu0 %v312, 8
        %v316 = vpop.permute.xlu0 %315
        %vm319 = vcmask 31744
        %v320 = vsel %vm319, %v291, %v302
        %v321 = vsel %vm319, %v287, %v304
        %vm322 = vcmask 64512
        %v323 = vsel %vm322, %v320, %v314
        %v324 = vsel %vm322, %v321, %v316
        %v326 = vlaneseq
        %v327 = vshrl.u32 %v326, 7
        %v328 = vsub.s32 0, %v327
        %v329 = vrot.slane %v281, %v328
        %vm331 = vcmask 97280
        %v333 = vsel %vm331, %v323, 0
        %v336 = vsel %vm331, %v324, 0
        %vm338 = vcmask 1043456
        %v340 = vsel %vm338, %v280, 0
        %342 = vmatprep.subr.mxu0 0.0
        %343 = vmatpush1.msra.mxu0 %v279
        %344 = vmatprep.subr.mxu0 0.0
        %345 = vmatpush1.msra.mxu0 %v340
        %346 = vmatprep.subr.mxu0 0.0
        %347 = vmatpush1.msra.mxu0 0.0
        %348 = vmatprep.subr.mxu0 0.0
        %349 = vmatpush1.msra.mxu0 0.0
        %350 = vmatprep.subr.mxu0 0.0
        %351 = vmatpush1.msra.mxu0 0.0
        %352 = vmatprep.subr.mxu0 0.0
        %353 = vmatpush1.msra.mxu0 0.0
        %354 = vmatprep.subr.mxu0 0.0
        %355 = vmatpush1.msra.mxu0 0.0
        %356 = vmatprep.subr.mxu0 0.0
        %357 = vmatpush1.msra.mxu0 0.0
        %358 = vmatprep.subr.mxu0 0.0
        %359 = vmatpush1.msra.mxu0 0.0
        %360 = vmatprep.subr.mxu0 0.0
        %361 = vmatpush1.msra.mxu0 0.0
        %362 = vmatprep.subr.mxu0 0.0
        %363 = vmatpush1.msra.mxu0 0.0
        %364 = vmatprep.subr.mxu0 0.0
        %365 = vmatpush1.msra.mxu0 0.0
        %366 = vmatprep.subr.mxu0 0.0
        %367 = vmatpush1.msra.mxu0 0.0
        %368 = vmatprep.subr.mxu0 0.0
        %369 = vmatpush1.msra.mxu0 0.0
        %370 = vmatprep.subr.mxu0 0.0
        %371 = vmatpush1.msra.mxu0 0.0
        %372 = vmatprep.subr.mxu0 0.0
        %373 = vmatpush1.msra.mxu0 0.0
        %374 = vmatprep.subr.mxu0 0.0
        %375 = vmatpush1.msra.mxu0 0.0
        %376 = vmatprep.subr.mxu0 0.0
        %377 = vmatpush1.msra.mxu0 0.0
        %378 = vmatprep.subr.mxu0 0.0
        %379 = vmatpush1.msra.mxu0 0.0
        %380 = vmatprep.subr.mxu0 0.0
        %381 = vmatpush1.msra.mxu0 0.0
        %382 = vmatprep.subr.mxu0 0.0
        %383 = vmatpush1.msra.mxu0 0.0
        %384 = vmatprep.subr.mxu0 0.0
        %385 = vmatpush1.msra.mxu0 0.0
        %386 = vmatprep.subr.mxu0 0.0
        %387 = vmatpush1.msra.mxu0 0.0
        %388 = vmatprep.subr.mxu0 0.0
        %389 = vmatpush1.msra.mxu0 0.0
        %390 = vmatprep.subr.mxu0 0.0
        %391 = vmatpush1.msra.mxu0 0.0
        %392 = vmatprep.subr.mxu0 0.0
        %393 = vmatpush1.msra.mxu0 0.0
        %394 = vmatprep.subr.mxu0 0.0
        %395 = vmatpush1.msra.mxu0 0.0
        %396 = vmatprep.subr.mxu0 0.0
        %397 = vmatpush1.msra.mxu0 0.0
        %398 = vmatprep.subr.mxu0 0.0
        %399 = vmatpush1.msra.mxu0 0.0
        %400 = vmatprep.subr.mxu0 0.0
        %401 = vmatpush1.msra.mxu0 0.0
        %402 = vmatprep.subr.mxu0 0.0
        %403 = vmatpush1.msra.mxu0 0.0
        %404 = vmatprep.subr.mxu0 0.0
        %405 = vmatpush1.msra.mxu0 0.0
        %406 = vmatprep.mubr.f32.mxu0 0.0
        %407 = vmatmul.mubr.f32.gmra.mrb[0].mxu0 %v333
        %v408 = vpop.f32.mrb[0].mxu0
        %v409 = vadd.f32 %v329, %v408
        %v410 = vpop.f32.mrb[0].mxu0
        %411 = vmatprep.mubr.f32.mxu0 0.0
        %412 = vmatmul.mubr.f32.gmra.mrb[0].mxu0 %v336
        %v413 = vpop.f32.mrb[0].mxu0
        %v414 = vadd.f32 %v329, %v413
        %v415 = vpop.f32.mrb[0].mxu0
        %416 = vdwg.mxu0
        %v417 = vmax.f32 %v409, 0.0
        %v418 = vmax.f32 %v414, 0.0
        %v419 = vld [vmem:[%s3] sm:$0xff]
        %v420 = vld [vmem:[%s3 + $0x8] sm:$0xff]
        %v421 = vld [vmem:[%s3 + $0x10] sm:$0xff]
        %v422 = vld [vmem:[%s4] sm:$0x1]
        %v425 = vrot.slane %v417, 7
        %v426 = vrot.slane %v418, 7
        %v427 = vsel %vm284, %v425, %v426
        %v431 = vsel %vm284, 0.0, %v425
        %v432 = vsel %vm284, %v426, 0.0
        %v435 = vrot.slane %v431, 1
        %v436 = vrot.slane %v427, 1
        %v437 = vsel %vm295, %v435, %v436
        %v438 = vrot.slane %v432, 1
        %v439 = vsel %vm295, %v436, %v438
        %440 = vrot.lane.b32.xlu0 %v437, 8
        %v441 = vpop.permute.xlu0 %440
        %442 = vrot.lane.b32.xlu0 %v439, 8
        %v443 = vpop.permute.xlu0 %442
        %v446 = vrot.slane %v431, 2
        %v447 = vrot.slane %v427, 2
        %v448 = vsel %vm307, %v446, %v447
        %v449 = vrot.slane %v432, 2
        %v450 = vsel %vm307, %v447, %v449
        %451 = vrot.lane.b32.xlu0 %v448, 16
        %v452 = vpop.permute.xlu0 %451
        %453 = vrot.lane.b32.xlu0 %v450, 16
        %v454 = vpop.permute.xlu0 %453
        %v457 = vsel %vm322, %v431, %v441
        %v458 = vsel %vm322, %v427, %v443
        %vm459 = vcmask 130048
        %v460 = vsel %vm459, %v457, %v452
        %v461 = vsel %vm459, %v458, %v454
        %v463 = vlaneseq
        %v464 = vshrl.u32 %v463, 7
        %v465 = vsub.s32 0, %v464
        %v466 = vrot.slane %v422, %v465
        %vm468 = vcmask 195584
        %v470 = vsel %vm468, %v460, 0
        %v473 = vsel %vm468, %v461, 0
        %475 = vmatprep.subr.mxu0 0.0
        %476 = vmatpush1.msra.mxu0 %v419
        %477 = vmatprep.subr.mxu0 0.0
        %478 = vmatpush1.msra.mxu0 %v420
        %479 = vmatprep.subr.mxu0 0.0
        %480 = vmatpush1.msra.mxu0 %v421
        %481 = vmatprep.subr.mxu0 0.0
        %482 = vmatpush1.msra.mxu0 0.0
        %483 = vmatprep.subr.mxu0 0.0
        %484 = vmatpush1.msra.mxu0 0.0
        %485 = vmatprep.subr.mxu0 0.0
        %486 = vmatpush1.msra.mxu0 0.0
        %487 = vmatprep.subr.mxu0 0.0
        %488 = vmatpush1.msra.mxu0 0.0
        %489 = vmatprep.subr.mxu0 0.0
        %490 = vmatpush1.msra.mxu0 0.0
        %491 = vmatprep.subr.mxu0 0.0
        %492 = vmatpush1.msra.mxu0 0.0
        %493 = vmatprep.subr.mxu0 0.0
        %494 = vmatpush1.msra.mxu0 0.0
        %495 = vmatprep.subr.mxu0 0.0
        %496 = vmatpush1.msra.mxu0 0.0
        %497 = vmatprep.subr.mxu0 0.0
        %498 = vmatpush1.msra.mxu0 0.0
        %499 = vmatprep.subr.mxu0 0.0
        %500 = vmatpush1.msra.mxu0 0.0
        %501 = vmatprep.subr.mxu0 0.0
        %502 = vmatpush1.msra.mxu0 0.0
        %503 = vmatprep.subr.mxu0 0.0
        %504 = vmatpush1.msra.mxu0 0.0
        %505 = vmatprep.subr.mxu0 0.0
        %506 = vmatpush1.msra.mxu0 0.0
        %507 = vmatprep.subr.mxu0 0.0
        %508 = vmatpush1.msra.mxu0 0.0
        %509 = vmatprep.subr.mxu0 0.0
        %510 = vmatpush1.msra.mxu0 0.0
        %511 = vmatprep.subr.mxu0 0.0
        %512 = vmatpush1.msra.mxu0 0.0
        %513 = vmatprep.subr.mxu0 0.0
        %514 = vmatpush1.msra.mxu0 0.0
        %515 = vmatprep.subr.mxu0 0.0
        %516 = vmatpush1.msra.mxu0 0.0
        %517 = vmatprep.subr.mxu0 0.0
        %518 = vmatpush1.msra.mxu0 0.0
        %519 = vmatprep.subr.mxu0 0.0
        %520 = vmatpush1.msra.mxu0 0.0
        %521 = vmatprep.subr.mxu0 0.0
        %522 = vmatpush1.msra.mxu0 0.0
        %523 = vmatprep.subr.mxu0 0.0
        %524 = vmatpush1.msra.mxu0 0.0
        %525 = vmatprep.subr.mxu0 0.0
        %526 = vmatpush1.msra.mxu0 0.0
        %527 = vmatprep.subr.mxu0 0.0
        %528 = vmatpush1.msra.mxu0 0.0
        %529 = vmatprep.subr.mxu0 0.0
        %530 = vmatpush1.msra.mxu0 0.0
        %531 = vmatprep.subr.mxu0 0.0
        %532 = vmatpush1.msra.mxu0 0.0
        %533 = vmatprep.subr.mxu0 0.0
        %534 = vmatpush1.msra.mxu0 0.0
        %535 = vmatprep.subr.mxu0 0.0
        %536 = vmatpush1.msra.mxu0 0.0
        %537 = vmatprep.subr.mxu0 0.0
        %538 = vmatpush1.msra.mxu0 0.0
        %539 = vmatprep.mubr.f32.mxu0 0.0
        %540 = vmatmul.mubr.f32.gmra.mrb[0].mxu0 %v470
        %v541 = vpop.f32.mrb[0].mxu0
        %v542 = vadd.f32 %v466, %v541
        %v543 = vpop.f32.mrb[0].mxu0
        %544 = vmatprep.mubr.f32.mxu0 0.0
        %545 = vmatmul.mubr.f32.gmra.mrb[0].mxu0 %v473
        %v546 = vpop.f32.mrb[0].mxu0
        %v547 = vadd.f32 %v466, %v546
        %v548 = vpop.f32.mrb[0].mxu0
        %549 = vdwg.mxu0
        %v550 = vmax.f32 %v542, 0.0
        %v551 = vmax.f32 %v547, 0.0
        %v552 = vld [vmem:[%s5] sm:$0xff]
        %v553 = vld [vmem:[%s5 + $0x8] sm:$0xff]
        %v554 = vld [vmem:[%s5 + $0x10] sm:$0xff]
        %v555 = vld [vmem:[%s5 + $0x18] sm:$0xff]
        %v556 = vld [vmem:[%s5 + $0x20] sm:$0xff]
        %v557 = vld [vmem:[%s5 + $0x28] sm:$0xff]
        %v558 = vld [vmem:[%s6] sm:$0x1]
        %v561 = vrot.slane %v550, 7
        %v562 = vrot.slane %v551, 7
        %v563 = vsel %vm284, %v561, %v562
        %v567 = vsel %vm284, 0.0, %v561
        %v568 = vsel %vm284, %v562, 0.0
        %v571 = vrot.slane %v567, 1
        %v572 = vrot.slane %v563, 1
        %v573 = vsel %vm295, %v571, %v572
        %v574 = vrot.slane %v568, 1
        %v575 = vsel %vm295, %v572, %v574
        %576 = vrot.lane.b32.xlu0 %v573, 16
        %v577 = vpop.permute.xlu0 %576
        %578 = vrot.lane.b32.xlu0 %v575, 16
        %v579 = vpop.permute.xlu0 %578
        %v582 = vrot.slane %v567, 2
        %v583 = vrot.slane %v563, 2
        %v584 = vsel %vm307, %v582, %v583
        %v585 = vrot.slane %v568, 2
        %v586 = vsel %vm307, %v583, %v585
        %587 = vrot.lane.b32.xlu0 %v584, 32
        %v588 = vpop.permute.xlu0 %587
        %589 = vrot.lane.b32.xlu0 %v586, 32
        %v590 = vpop.permute.xlu0 %589
        %v593 = vsel %vm459, %v567, %v577
        %v594 = vsel %vm459, %v563, %v579
        %vm595 = vcmask 261120
        %v596 = vsel %vm595, %v593, %v588
        %v597 = vsel %vm595, %v594, %v590
        %v599 = vlaneseq
        %v600 = vshrl.u32 %v599, 7
        %v601 = vsub.s32 0, %v600
        %v602 = vrot.slane %v558, %v601
        %vm604 = vcmask 392192
        %v606 = vsel %vm604, %v596, 0
        %v609 = vsel %vm604, %v597, 0
        %611 = vmatprep.subr.mxu0 0.0
        %612 = vmatpush1.msra.mxu0 %v552
        %613 = vmatprep.subr.mxu0 0.0
        %614 = vmatpush1.msra.mxu0 %v553
        %615 = vmatprep.subr.mxu0 0.0
        %616 = vmatpush1.msra.mxu0 %v554
        %617 = vmatprep.subr.mxu0 0.0
        %618 = vmatpush1.msra.mxu0 %v555
        %619 = vmatprep.subr.mxu0 0.0
        %620 = vmatpush1.msra.mxu0 %v556
        %621 = vmatprep.subr.mxu0 0.0
        %622 = vmatpush1.msra.mxu0 %v557
        %623 = vmatprep.subr.mxu0 0.0
        %624 = vmatpush1.msra.mxu0 0.0
        %625 = vmatprep.subr.mxu0 0.0
        %626 = vmatpush1.msra.mxu0 0.0
        %627 = vmatprep.subr.mxu0 0.0
        %628 = vmatpush1.msra.mxu0 0.0
        %629 = vmatprep.subr.mxu0 0.0
        %630 = vmatpush1.msra.mxu0 0.0
        %631 = vmatprep.subr.mxu0 0.0
        %632 = vmatpush1.msra.mxu0 0.0
        %633 = vmatprep.subr.mxu0 0.0
        %634 = vmatpush1.msra.mxu0 0.0
        %635 = vmatprep.subr.mxu0 0.0
        %636 = vmatpush1.msra.mxu0 0.0
        %637 = vmatprep.subr.mxu0 0.0
        %638 = vmatpush1.msra.mxu0 0.0
        %639 = vmatprep.subr.mxu0 0.0
        %640 = vmatpush1.msra.mxu0 0.0
        %641 = vmatprep.subr.mxu0 0.0
        %642 = vmatpush1.msra.mxu0 0.0
        %643 = vmatprep.subr.mxu0 0.0
        %644 = vmatpush1.msra.mxu0 0.0
        %645 = vmatprep.subr.mxu0 0.0
        %646 = vmatpush1.msra.mxu0 0.0
        %647 = vmatprep.subr.mxu0 0.0
        %648 = vmatpush1.msra.mxu0 0.0
        %649 = vmatprep.subr.mxu0 0.0
        %650 = vmatpush1.msra.mxu0 0.0
        %651 = vmatprep.subr.mxu0 0.0
        %652 = vmatpush1.msra.mxu0 0.0
        %653 = vmatprep.subr.mxu0 0.0
        %654 = vmatpush1.msra.mxu0 0.0
        %655 = vmatprep.subr.mxu0 0.0
        %656 = vmatpush1.msra.mxu0 0.0
        %657 = vmatprep.subr.mxu0 0.0
        %658 = vmatpush1.msra.mxu0 0.0
        %659 = vmatprep.subr.mxu0 0.0
        %660 = vmatpush1.msra.mxu0 0.0
        %661 = vmatprep.subr.mxu0 0.0
        %662 = vmatpush1.msra.mxu0 0.0
        %663 = vmatprep.subr.mxu0 0.0
        %664 = vmatpush1.msra.mxu0 0.0
        %665 = vmatprep.subr.mxu0 0.0
        %666 = vmatpush1.msra.mxu0 0.0
        %667 = vmatprep.subr.mxu0 0.0
        %668 = vmatpush1.msra.mxu0 0.0
        %669 = vmatprep.subr.mxu0 0.0
        %670 = vmatpush1.msra.mxu0 0.0
        %671 = vmatprep.subr.mxu0 0.0
        %672 = vmatpush1.msra.mxu0 0.0
        %673 = vmatprep.subr.mxu0 0.0
        %674 = vmatpush1.msra.mxu0 0.0
        %675 = vmatprep.mubr.f32.mxu0 0.0
        %676 = vmatmul.mubr.f32.gmra.mrb[0].mxu0 %v606
        %v677 = vpop.f32.mrb[0].mxu0
        %v678 = vadd.f32 %v602, %v677
        %v679 = vpop.f32.mrb[0].mxu0
        %680 = vmatprep.mubr.f32.mxu0 0.0
        %681 = vmatmul.mubr.f32.gmra.mrb[0].mxu0 %v609
        %v682 = vpop.f32.mrb[0].mxu0
        %v683 = vadd.f32 %v602, %v682
        %v684 = vpop.f32.mrb[0].mxu0
        %685 = vdwg.mxu0
        %v686 = vmax.f32 %v678, 0.0
        %v687 = vmax.f32 %v683, 0.0
        %688 = vst.msk [vmem:[%s271] sm:$0xff] %vm468, %v686
        %689 = vst.msk [vmem:[%s271 + $0x8] sm:$0xff] %vm468, %v687
        %s690 = sand.u32 %s181, 1
        %s691 = scalar_lea.sflag [#allocation3], %s690
        %s692 = sand.u32 %s181, 1
        %s693 = smul.addr %s692, 16
        %s694 = scalar_lea.vmem [#allocation2], %s693
        // Predicated region
        $region49: #{conv_nn_forward.1} parent=47 // pred_check
          %p695 = pneg %p191
        $region50: #{conv_nn_forward.1} parent=47 // pred_check_branch
          %697 = sbr.rel (%p695) target = $region52
        $region51: #{conv_nn_forward.1} parent=47 // pred_region
          %s699 = ssub.s32 256, 256
          %700 = vsyncadd %s691, %s699
          %s701 = smul.addr %s21, 2
          %s702 = smul.addr %s701, 128
          %s703 = scalar_lea.hbm %s7, %s702
          %s704 = sshll.u32 %s694, 4
          %s705 = int_to_ptr.vmem [resolvable:$true] %s704
          %710 = dma.vmem_to_hbm [thread:$0]  %s705, 256, %s703, %s691, 128, 128, 8
        $region52: #{conv_nn_forward.1} parent=47 // pred_fallthru
          _
      $region48: #{conv_nn_forward.1} parent=5 // pred_fallthru
        _
      %p711 = scmp.le.s32.totalorder 2, %s16
      // Predicated region
      $region53: #{conv_nn_forward.1} parent=5 // pred_check
        %p712 = pneg %p711
      $region54: #{conv_nn_forward.1} parent=5 // pred_check_branch
        %714 = sbr.rel (%p712) target = $region56
      $region55: #{conv_nn_forward.1} parent=5 // pred_region
        %s715 = ssub.s32 %s16, 2
        // Predicated region
        $region57: #{conv_nn_forward.1} parent=55 // pred_check
          %p716 = pneg %p197
        $region58: #{conv_nn_forward.1} parent=55 // pred_check_branch
          %718 = sbr.rel (%p716) target = $region60
        $region59: #{conv_nn_forward.1} parent=55 // pred_region
          %s719 = sand.u32 %s182, 1
          %s720 = scalar_lea.sflag [#allocation3], %s719
          %s721 = sand.u32 %s182, 1
          %s722 = smul.addr %s721, 16
          %s723 = scalar_lea.vmem [#allocation2], %s722
          %724 = dma.done %s720, 256
        $region60: #{conv_nn_forward.1} parent=55 // pred_fallthru
          _
      $region56: #{conv_nn_forward.1} parent=5 // pred_fallthru
        _
    $region6: #{conv_nn_forward.1} parent=1 // loop_footer
      %s20 = sadd.s32 1, %s16
    $region7: #{conv_nn_forward.1} parent=1 // loop_footer_branch
      %15 = sbr.rel target = $region3
    $region8: #{conv_nn_forward.1} parent=1 // loop_exit
      _
    %725 = vsyncpa [#allocation3], 1
    %s726 = scalar_lea.sflag [#allocation3], 1
    %727 = vsyncpa %s726, 1

</llo_original>
